<compile_context>
chip_gen: v5e
topology: v5e:2x2
jax: 0.10.0
libtpu: 0.0.40
codegen_flags: <defaults>
</compile_context>

<pallas_src>
import functools
import math

import jax
import jax.numpy as jnp
from jax import lax
from jax.experimental import pallas as pl
from jax.experimental.pallas import tpu as pltpu

MAX_LEN = 5000
_TARGET_BLOCK_BYTES = 1 << 20  # ~1 MiB per x block (review: 0.5-2 MiB sweet spot)


def make_pe_table(d_model, max_len=MAX_LEN):
    """Precompute the positional-encoding table (the PyTorch register_buffer)."""
    position = jnp.arange(max_len, dtype=jnp.float32)[:, None]
    div_term = jnp.exp(
        jnp.arange(0, d_model, 2, dtype=jnp.float32) * (-math.log(10000.0) / d_model)
    )
    angles = position * div_term                      # (max_len, d_model // 2)
    pe = jnp.zeros((max_len, d_model), jnp.float32)
    pe = pe.at[:, 0::2].set(jnp.sin(angles))
    pe = pe.at[:, 1::2].set(jnp.cos(angles))
    return pe


def _hash_u32(x):
    """lowbias32 finalizer: uint32 -> uint32 with good avalanche (portable jnp ops)."""
    x = x ^ (x >> 16)
    x = x * jnp.uint32(0x7FEB352D)
    x = x ^ (x >> 15)
    x = x * jnp.uint32(0x846CA68B)
    x = x ^ (x >> 16)
    return x


def pe_kernel_eval(x_ref, pe_ref, o_ref):
    # x block: (TILE_B, TILE_S, D); pe block: (TILE_S, D) broadcasts over batch.
    y = x_ref[...].astype(jnp.float32) + pe_ref[...][None, :, :]
    o_ref[...] = y.astype(o_ref.dtype)   # cast on store (bf16-safe)


def pe_kernel_train(seed_ref, x_ref, pe_ref, o_ref, *,
                    dropout_rate, tile_b, tile_s, d_model, seq_len):
    y = x_ref[...].astype(jnp.float32) + pe_ref[...][None, :, :]

    # Stateless per-element dropout mask from a position hash (cheap VPU int ops;
    # the kernel is HBM-bound so this compute hides entirely under the DMA).
    s_off = pl.program_id(0) * tile_s
    b_off = pl.program_id(1) * tile_b
    shape = (tile_b, tile_s, d_model)
    b_idx = lax.broadcasted_iota(jnp.int32, shape, 0) + b_off
    s_idx = lax.broadcasted_iota(jnp.int32, shape, 1) + s_off
    c_idx = lax.broadcasted_iota(jnp.int32, shape, 2)
    flat = (b_idx * seq_len + s_idx) * d_model + c_idx   # unique per element (mod 2^32)
    u = _hash_u32((flat ^ seed_ref[0]).astype(jnp.uint32))

    threshold = jnp.uint32(min(int(dropout_rate * 4294967296.0), 4294967295))
    keep = u >= threshold                                 # P(keep) = 1 - p
    scale = jnp.float32(1.0 / (1.0 - dropout_rate))       # static constant, no divide
    o_ref[...] = jnp.where(keep, y * scale, jnp.float32(0.0)).astype(o_ref.dtype)


def _select_tiles(b, s, d, itemsize):
    """Pick (tile_b, tile_s) so one x block is ~_TARGET_BLOCK_BYTES."""
    target_rows = max(8, _TARGET_BLOCK_BYTES // max(1, d * itemsize))
    # Sequence tile: largest multiple of 8 dividing S, capped near the target.
    tile_s = None
    cap = min(s, target_rows)
    t = cap - (cap % 8)
    while t >= 8:
        if s % t == 0:
            tile_s = t
            break
        t -= 8
    if tile_s is None:
        tile_s = s          # ragged S: a full-dim block is always legal
    # Batch tile: largest divisor of B that keeps the block near the target size.
    rows_left = max(1, target_rows // tile_s)
    tile_b = 1
    t = min(b, rows_left)
    while t >= 1:
        if b % t == 0:
            tile_b = t
            break
        t -= 1
    return tile_b, tile_s


def positional_encoding_forward(x, pe_table, *, dropout_rate, deterministic=True,
                                seed=0):
    b, s, d = x.shape
    assert d == pe_table.shape[1], "d_model mismatch with pe table"
    assert s <= pe_table.shape[0], "sequence longer than max_len"

    tile_b, tile_s = _select_tiles(b, s, d, jnp.dtype(x.dtype).itemsize)
    pe_slice = pe_table[:s]                               # (S, D) f32

    # Grid: (seq_tiles, batch_tiles).  The pe block index is constant over the
    # inner (fastest-varying) batch axis, so Pallas skips re-fetching pe and it
    # effectively stays VMEM-resident per seq tile.
    grid = (s // tile_s, b // tile_b)
    x_spec = pl.BlockSpec((tile_b, tile_s, d), lambda si, bi: (bi, si, 0))
    pe_spec = pl.BlockSpec((tile_s, d), lambda si, bi: (si, 0))
    out_spec = pl.BlockSpec((tile_b, tile_s, d), lambda si, bi: (bi, si, 0))
    out_shape = jax.ShapeDtypeStruct((b, s, d), x.dtype)
    cparams = pltpu.CompilerParams(dimension_semantics=("parallel", "parallel"))

    if deterministic or dropout_rate == 0.0:
        # Eval / inference: nn.Dropout is the identity; no seed input at all.
        return pl.pallas_call(
            pe_kernel_eval,
            out_shape=out_shape,
            grid=grid,
            in_specs=[x_spec, pe_spec],
            out_specs=out_spec,
            compiler_params=cparams,
        )(x, pe_slice)

    kernel = functools.partial(
        pe_kernel_train,
        dropout_rate=float(dropout_rate),
        tile_b=tile_b,
        tile_s=tile_s,
        d_model=d,
        seq_len=s,
    )
    seed_arr = jnp.asarray([seed], dtype=jnp.int32)
    return pl.pallas_call(
        kernel,
        out_shape=out_shape,
        grid=grid,
        in_specs=[
            pl.BlockSpec(memory_space=pltpu.MemorySpace.SMEM),   # seed scalar
            x_spec,
            pe_spec,
        ],
        out_specs=out_spec,
        compiler_params=cparams,
    )(seed_arr, x, pe_slice)


if __name__ == "__main__":
    key = jax.random.PRNGKey(0)
    B, S, D_MODEL = 4, 32, 128      # small, lane-dense (D = 128) shapes
    DROPOUT = 0.1

    x = jax.random.normal(key, (B, S, D_MODEL), jnp.float32)
    pe_table = make_pe_table(D_MODEL, max_len=MAX_LEN)
    ref = x + pe_table[None, :S, :]

    # --- Eval mode (dropout = identity): exact check vs pure-JAX reference. ---
    out = positional_encoding_forward(
        x, pe_table, dropout_rate=DROPOUT, deterministic=True
    )
    out = jax.block_until_ready(out)
    assert out.shape == (B, S, D_MODEL)
    assert jnp.allclose(out, ref, atol=1e-5, rtol=1e-5), "mismatch vs reference (eval)"

    # --- bf16 I/O path (cast-on-store): loose-tolerance check. ---
    x_bf = x.astype(jnp.bfloat16)
    out_bf = positional_encoding_forward(
        x_bf, pe_table, dropout_rate=DROPOUT, deterministic=True
    )
    out_bf = jax.block_until_ready(out_bf)
    ref_bf = (x_bf.astype(jnp.float32) + pe_table[None, :S, :]).astype(jnp.bfloat16)
    assert out_bf.dtype == jnp.bfloat16
    assert jnp.allclose(out_bf.astype(jnp.float32), ref_bf.astype(jnp.float32),
                        atol=1e-2, rtol=1e-2), "mismatch vs reference (bf16 eval)"

    # --- Training mode: in-kernel stateless-hash dropout, statistical check. ---
    out_tr = positional_encoding_forward(
        x, pe_table, dropout_rate=DROPOUT, deterministic=False, seed=123
    )
    out_tr = jax.block_until_ready(out_tr)
    expected_kept = ref * (1.0 / (1.0 - DROPOUT))
    dropped = out_tr == 0.0
    frac_dropped = float(jnp.mean(dropped.astype(jnp.float32)))
    assert 0.03 <= frac_dropped <= 0.20, f"drop fraction {frac_dropped} far from p"
    assert jnp.allclose(
        jnp.where(dropped, 0.0, out_tr),
        jnp.where(dropped, 0.0, expected_kept),
        atol=1e-5, rtol=1e-5,
    ), "kept elements not scaled by 1/(1-p)"

    print("KERNEL_OK")
</pallas_src>

<mosaic_0001>
module attributes {stable_mosaic.version = 11 : i64} {
  func.func @pe_kernel_eval(%arg0: i32, %arg1: i32, %arg2: memref<4x32x128xf32, #tpu.memory_space<vmem>>, %arg3: memref<32x128xf32, #tpu.memory_space<vmem>>, %arg4: memref<4x32x128xf32, #tpu.memory_space<vmem>>) attributes {dimension_semantics = [#tpu.dimension_semantics<parallel>, #tpu.dimension_semantics<parallel>], iteration_bounds = array<i64: 1, 1>, scalar_prefetch = 0 : i64, scratch_operands = 0 : i64, tpu.core_type = #tpu.core_type<tc>, window_params = [{transform_indices = @transform_0, window_bounds = array<i64: 4, 32, 128>}, {transform_indices = @transform_1, window_bounds = array<i64: 32, 128>}, {transform_indices = @transform_2, window_bounds = array<i64: 4, 32, 128>}]} {
    %c0 = arith.constant 0 : index
    %c0_0 = arith.constant 0 : index
    %c0_1 = arith.constant 0 : index
    %0 = vector.load %arg2[%c0, %c0_0, %c0_1] : memref<4x32x128xf32, #tpu.memory_space<vmem>>, vector<4x32x128xf32>
    %c0_2 = arith.constant 0 : index
    %c0_3 = arith.constant 0 : index
    %1 = vector.load %arg3[%c0_2, %c0_3] : memref<32x128xf32, #tpu.memory_space<vmem>>, vector<32x128xf32>
    %2 = vector.shape_cast %1 : vector<32x128xf32> to vector<1x32x128xf32>
    %3 = vector.broadcast %2 : vector<1x32x128xf32> to vector<4x32x128xf32>
    %4 = arith.addf %0, %3 : vector<4x32x128xf32>
    %c0_4 = arith.constant 0 : index
    %c0_5 = arith.constant 0 : index
    %c0_6 = arith.constant 0 : index
    %5 = vector.load %arg4[%c0_4, %c0_5, %c0_6] : memref<4x32x128xf32, #tpu.memory_space<vmem>>, vector<4x32x128xf32>
    tpu.vector_store %arg4[%c0_4, %c0_5, %c0_6], %4 {strides = array<i32>} : memref<4x32x128xf32, #tpu.memory_space<vmem>>, vector<4x32x128xf32>,
    return
  }
  func.func @transform_0(%arg0: i32, %arg1: i32) -> (i32, i32, i32) {
    %c0_i32 = arith.constant 0 : i32
    %c0_i32_0 = arith.constant 0 : i32
    return %arg1, %arg0, %c0_i32 : i32, i32, i32
  }
  func.func @transform_1(%arg0: i32, %arg1: i32) -> (i32, i32) {
    %c0_i32 = arith.constant 0 : i32
    %c0_i32_0 = arith.constant 0 : i32
    return %arg0, %c0_i32 : i32, i32
  }
  func.func @transform_2(%arg0: i32, %arg1: i32) -> (i32, i32, i32) {
    %c0_i32 = arith.constant 0 : i32
    %c0_i32_0 = arith.constant 0 : i32
    return %arg1, %arg0, %c0_i32 : i32, i32, i32
  }
}

</mosaic_0001>

<llo_original>
// kernel: tpu_custom_call.1
$region0: #{tpu_custom_call.1}
  #allocation0 [shape = 'u32[]', space=smem, size = 0x4, offset = 0x4, fixed_abs, tag = 'smem constant byte address 0x4 - core index']
  #allocation1 [shape = 'u32[72,128]{1,0:T(1,128)}', space=vmem, size = 0x9000, scoped, tag = 'internal scratch']
  %s0 = inlined_call_operand.hbm [shape: f32[4,32,128], index: 0, kind: input, shape index: {}]
  %s1 = inlined_call_operand.hbm [shape: f32[32,128], index: 1, kind: input, shape index: {}]
  %s2 = inlined_call_operand.hbm [shape: f32[4,32,128], index: 2, kind: output, shape index: {}]
  %s3 = sld [smem:[#allocation0]]
  $region26: #{tpu_custom_call.1} parent=0
    _
  %s5 = ssub.s32 1, %s3
  %s6 = scalar_select 0, %s5, %s3
  $region1: #{tpu_custom_call.1} parent=0
    #allocation2 [shape = 'u8[65536]{0}', space=vmem, size = 0x10000, scoped, tag = 'input window, operand 0, single buffered']
    #allocation3 [shape = 's32[1]{0}', space=sflag, size = 0x4, scoped, tag = 'scoped memory for tpu_custom_call.1']
    #allocation4 [shape = 's32[1]{0}', space=sflag, size = 0x4, scoped, tag = 'scoped memory for tpu_custom_call.1']
    #allocation5 [shape = 'u8[16384]{0}', space=vmem, size = 0x4000, scoped, tag = 'input window, operand 1, single buffered']
    #allocation6 [shape = 's32[1]{0}', space=sflag, size = 0x4, scoped, tag = 'scoped memory for tpu_custom_call.1']
    #allocation7 [shape = 'u8[65536]{0}', space=vmem, size = 0x10000, scoped, tag = 'output window, operand 0, single buffered']
    %7 = vsyncpa [#allocation3], 0
    %8 = vsyncpa [#allocation6], 0
    %9 = vsyncpa [#allocation4], 0
    // Predicated region
    $region2: #{tpu_custom_call.1} parent=1 // pred_check
      _
    $region3: #{tpu_custom_call.1} parent=1 // pred_check_branch
      %11 = sbr.rel (0) target = $region5
    $region4: #{tpu_custom_call.1} parent=1 // pred_region
      %13 = vsyncadd [#allocation3], 0
      %s14 = sshll.u32 %s0, 4
      %s15 = int_to_ptr.hbm [resolvable:$true] %s14
      %s16 = sshll.u32 [#allocation2], 4
      %s17 = int_to_ptr.vmem [resolvable:$true] %s16
      %22 = dma.hbm_to_vmem [thread:$0]  %s15, 2048, %s17, [#allocation3], 128, 128, 8
    $region5: #{tpu_custom_call.1} parent=1 // pred_fallthru
      _
    // Predicated region
    $region6: #{tpu_custom_call.1} parent=1 // pred_check
      _
    $region7: #{tpu_custom_call.1} parent=1 // pred_check_branch
      %24 = sbr.rel (0) target = $region9
    $region8: #{tpu_custom_call.1} parent=1 // pred_region
      %26 = vsyncadd [#allocation6], 0
      %s27 = sshll.u32 %s1, 4
      %s28 = int_to_ptr.hbm [resolvable:$true] %s27
      %s29 = sshll.u32 [#allocation5], 4
      %s30 = int_to_ptr.vmem [resolvable:$true] %s29
      %35 = dma.hbm_to_vmem [thread:$0]  %s28, 512, %s30, [#allocation6], 128, 128, 8
    $region9: #{tpu_custom_call.1} parent=1 // pred_fallthru
      _
    // Predicated region
    $region10: #{tpu_custom_call.1} parent=1 // pred_check
      _
    $region11: #{tpu_custom_call.1} parent=1 // pred_check_branch
      %37 = sbr.rel (0) target = $region13
    $region12: #{tpu_custom_call.1} parent=1 // pred_region
      %39 = dma.done [#allocation3], 2048
    $region13: #{tpu_custom_call.1} parent=1 // pred_fallthru
      _
    // Predicated region
    $region14: #{tpu_custom_call.1} parent=1 // pred_check
      _
    $region15: #{tpu_custom_call.1} parent=1 // pred_check_branch
      %41 = sbr.rel (0) target = $region17
    $region16: #{tpu_custom_call.1} parent=1 // pred_region
      %43 = dma.done [#allocation6], 512
    $region17: #{tpu_custom_call.1} parent=1 // pred_fallthru
      _
    %v44 = vld [vmem:[#allocation2] sm:$0xff]
    %v45 = vld [vmem:[#allocation2 + $0x8] sm:$0xff]
    %v46 = vld [vmem:[#allocation2 + $0x10] sm:$0xff]
    %v47 = vld [vmem:[#allocation2 + $0x18] sm:$0xff]
    %v48 = vld [vmem:[#allocation2 + $0x20] sm:$0xff]
    %v49 = vld [vmem:[#allocation2 + $0x28] sm:$0xff]
    %v50 = vld [vmem:[#allocation2 + $0x30] sm:$0xff]
    %v51 = vld [vmem:[#allocation2 + $0x38] sm:$0xff]
    %v52 = vld [vmem:[#allocation2 + $0x40] sm:$0xff]
    %v53 = vld [vmem:[#allocation2 + $0x48] sm:$0xff]
    %v54 = vld [vmem:[#allocation2 + $0x50] sm:$0xff]
    %v55 = vld [vmem:[#allocation2 + $0x58] sm:$0xff]
    %v56 = vld [vmem:[#allocation2 + $0x60] sm:$0xff]
    %v57 = vld [vmem:[#allocation2 + $0x68] sm:$0xff]
    %v58 = vld [vmem:[#allocation2 + $0x70] sm:$0xff]
    %v59 = vld [vmem:[#allocation2 + $0x78] sm:$0xff]
    %v60 = vld [vmem:[#allocation5] sm:$0xff]
    %v61 = vld [vmem:[#allocation5 + $0x8] sm:$0xff]
    %v62 = vld [vmem:[#allocation5 + $0x10] sm:$0xff]
    %v63 = vld [vmem:[#allocation5 + $0x18] sm:$0xff]
    %v64 = vadd.f32 %v44, %v60
    %v65 = vadd.f32 %v45, %v61
    %v66 = vadd.f32 %v46, %v62
    %v67 = vadd.f32 %v47, %v63
    %v68 = vadd.f32 %v48, %v60
    %v69 = vadd.f32 %v49, %v61
    %v70 = vadd.f32 %v50, %v62
    %v71 = vadd.f32 %v51, %v63
    %v72 = vadd.f32 %v52, %v60
    %v73 = vadd.f32 %v53, %v61
    %v74 = vadd.f32 %v54, %v62
    %v75 = vadd.f32 %v55, %v63
    %v76 = vadd.f32 %v56, %v60
    %v77 = vadd.f32 %v57, %v61
    %v78 = vadd.f32 %v58, %v62
    %v79 = vadd.f32 %v59, %v63
    %80 = vst [vmem:[#allocation7] sm:$0xff] %v64
    %81 = vst [vmem:[#allocation7 + $0x8] sm:$0xff] %v65
    %82 = vst [vmem:[#allocation7 + $0x10] sm:$0xff] %v66
    %83 = vst [vmem:[#allocation7 + $0x18] sm:$0xff] %v67
    %84 = vst [vmem:[#allocation7 + $0x20] sm:$0xff] %v68
    %85 = vst [vmem:[#allocation7 + $0x28] sm:$0xff] %v69
    %86 = vst [vmem:[#allocation7 + $0x30] sm:$0xff] %v70
    %87 = vst [vmem:[#allocation7 + $0x38] sm:$0xff] %v71
    %88 = vst [vmem:[#allocation7 + $0x40] sm:$0xff] %v72
    %89 = vst [vmem:[#allocation7 + $0x48] sm:$0xff] %v73
    %90 = vst [vmem:[#allocation7 + $0x50] sm:$0xff] %v74
    %91 = vst [vmem:[#allocation7 + $0x58] sm:$0xff] %v75
    %92 = vst [vmem:[#allocation7 + $0x60] sm:$0xff] %v76
    %93 = vst [vmem:[#allocation7 + $0x68] sm:$0xff] %v77
    %94 = vst [vmem:[#allocation7 + $0x70] sm:$0xff] %v78
    %95 = vst [vmem:[#allocation7 + $0x78] sm:$0xff] %v79
    // Predicated region
    $region18: #{tpu_custom_call.1} parent=1 // pred_check
      _
    $region19: #{tpu_custom_call.1} parent=1 // pred_check_branch
      %97 = sbr.rel (0) target = $region21
    $region20: #{tpu_custom_call.1} parent=1 // pred_region
      %99 = vsyncadd [#allocation4], 0
      %s100 = sshll.u32 [#allocation7], 4
      %s101 = int_to_ptr.vmem [resolvable:$true] %s100
      %s102 = sshll.u32 %s2, 4
      %s103 = int_to_ptr.hbm [resolvable:$true] %s102
      %108 = dma.vmem_to_hbm [thread:$0]  %s101, 2048, %s103, [#allocation4], 128, 128, 8
    $region21: #{tpu_custom_call.1} parent=1 // pred_fallthru
      _
    // Predicated region
    $region22: #{tpu_custom_call.1} parent=1 // pred_check
      _
    $region23: #{tpu_custom_call.1} parent=1 // pred_check_branch
      %110 = sbr.rel (0) target = $region25
    $region24: #{tpu_custom_call.1} parent=1 // pred_region
      %112 = dma.done [#allocation4], 2048
    $region25: #{tpu_custom_call.1} parent=1 // pred_fallthru
      _
    %113 = vsyncpa [#allocation3], 1
    %114 = vsyncpa [#allocation6], 1
    %115 = vsyncpa [#allocation4], 1

</llo_original>
